<compile_context>
chip_gen: v7x
topology: tpu7x:2x2x1
jax: 0.10.0
libtpu: 0.0.40
codegen_flags: <defaults>
</compile_context>

<pallas_src>
import jax
import jax.numpy as jnp
from jax.experimental import pallas as pl
from jax.experimental.pallas import tpu as pltpu
import numpy as np


def td3_critic_kernel(s_ref, a_ref,
                      w1s_ref, w1a_ref, b1_ref,
                      w2s_ref, b2s_ref, w2a_ref,
                      w3_ref, b3_ref,
                      q_ref):
    # Up-cast immediately after load (no-op for f32 inputs). All elementwise
    # math below stays f32, so the optional bf16 mode only narrows the HBM
    # input stream (v5e-safe: its VPU has no bf16 path).
    s = s_ref[...].astype(jnp.float32)
    a = a_ref[...].astype(jnp.float32)

    # layer 1: relu([state | action] @ W1 + b1), concat folded into a
    #          row-split weight (two dots against resident VMEM weights).
    f1 = jnp.dot(s, w1s_ref[...], preferred_element_type=jnp.float32)
    f1 = f1 + jnp.dot(a, w1a_ref[...], preferred_element_type=jnp.float32)
    f1 = jnp.maximum(f1 + b1_ref[...], 0.0)

    # layer 2: relu(f1 @ W2s + b2s + action @ W2a)   (W2a has no bias)
    f2 = jnp.dot(f1, w2s_ref[...], preferred_element_type=jnp.float32)
    f2 = f2 + jnp.dot(a, w2a_ref[...], preferred_element_type=jnp.float32)
    f2 = jnp.maximum(f2 + b2s_ref[...], 0.0)

    # layer 3 (lane-dense): q (n_out, tb) = W3 (n_out, f2) . f2^T.
    # NT dimension numbers (both operands contract their last dim) => the
    # result has the batch along lanes, so the store below is an unmasked,
    # full-lane vst instead of tb/8 masked column stores.
    q = jax.lax.dot_general(w3_ref[...], f2,
                            (((1,), (1,)), ((), ())),
                            preferred_element_type=jnp.float32)
    q_ref[...] = (q + b3_ref[...]).astype(q_ref.dtype)


def _round_up(x, m):
    return ((x + m - 1) // m) * m


def _choose_batch_tile(B, cap):
    """Pick (tile_b, padded_B).

    B <= cap : one grid step, block == full (padded-to-8) batch.
    B  > cap : 128-aligned tile ~= ceil(B / n_steps), so the lane-dense output
               block stays on the (8,128) grid and pad waste is <128 rows/step.
    """
    cap = max(_round_up(cap, 128), 128)
    if B <= cap:
        tb = _round_up(max(B, 1), 8)
        return tb, tb
    n_steps = -(-B // cap)                      # ceil
    tb = _round_up(-(-B // n_steps), 128)       # <= cap since cap % 128 == 0
    return tb, _round_up(B, tb)


def td3_critic_forward(state, action, params, *, tile_b=8192, bf16_inputs=False):
    """Pallas-backed forward pass. Returns squeezed q values (like torch.squeeze).

    bf16_inputs=True narrows only the state/action HBM stream (f32 math inside);
    not bit-exact with the f32 reference.
    """
    B, dim_state = state.shape
    dim_action = action.shape[1]
    n_output = params["w3"].shape[0]

    in_dtype = jnp.bfloat16 if bf16_inputs else jnp.float32
    state = state.astype(in_dtype)
    action = action.astype(in_dtype)

    tb, Bp = _choose_batch_tile(B, tile_b)
    if Bp != B:
        pad = Bp - B
        state = jnp.pad(state, ((0, pad), (0, 0)))
        action = jnp.pad(action, ((0, pad), (0, 0)))

    grid = (Bp // tb,)

    def batch_spec(feat):
        return pl.BlockSpec((tb, feat), lambda i: (i, 0))

    def const_spec(arr):
        # Full-array block, constant block index -> stays VMEM-resident.
        return pl.BlockSpec(arr.shape, lambda i: (0, 0))

    weight_args = (params["w1s"], params["w1a"], params["b1"],
                   params["w2s"], params["b2s"], params["w2a"],
                   params["w3"], params["b3"])

    q = pl.pallas_call(
        td3_critic_kernel,
        out_shape=jax.ShapeDtypeStruct((n_output, Bp), jnp.float32),
        grid=grid,
        in_specs=[batch_spec(dim_state),
                  batch_spec(dim_action)] + [const_spec(w) for w in weight_args],
        out_specs=pl.BlockSpec((n_output, tb), lambda i: (0, i)),
        compiler_params=pltpu.CompilerParams(
            dimension_semantics=("parallel",)),
    )(state, action, *weight_args)

    q = q[:, :B].T            # drop padded rows, back to (B, n_output)
    return jnp.squeeze(q)     # torch.squeeze removes all size-1 dims


def init_params(key, dim_state, dim_action, n_features, n_output):
    """Deterministic init matching the PyTorch module's __init__ semantics.

    Hidden weights stored (in, out); W1 is row-split into W1_s / W1_a. W3 is
    stored PyTorch-style (out, in) for the NT layer-3 matmul; b3 is (out, 1)
    so it broadcasts over the lane-dense q row. Biases use PyTorch's default
    Linear bias init U(-1/sqrt(fan_in), 1/sqrt(fan_in)).
    """
    f1, f2 = n_features
    k = jax.random.split(key, 7)

    def u(key, shape, bound):
        return jax.random.uniform(key, shape, jnp.float32, -bound, bound)

    fan_h1 = dim_state + dim_action
    w1_full = u(k[0], (fan_h1, f1), 1.0 / np.sqrt(fan_h1))
    return {
        "w1s": w1_full[:dim_state, :],
        "w1a": w1_full[dim_state:, :],
        "b1":  u(k[1], (1, f1),          1.0 / np.sqrt(fan_h1)),
        "w2s": u(k[2], (f1, f2),         1.0 / np.sqrt(f1)),
        "b2s": u(k[3], (1, f2),          1.0 / np.sqrt(f1)),
        "w2a": u(k[4], (dim_action, f2), 1.0 / np.sqrt(dim_action)),
        # h3: weight U(-0.003, 0.003); bias default U(-1/sqrt(f2), 1/sqrt(f2))
        "w3":  jax.random.uniform(k[5], (n_output, f2), jnp.float32, -0.003, 0.003),
        "b3":  u(k[6], (n_output, 1),    1.0 / np.sqrt(f2)),
    }


def reference_forward(state, action, params):
    """Plain-JAX reference mirroring the PyTorch forward."""
    state = state.astype(jnp.float32)
    action = action.astype(jnp.float32)
    sa = jnp.concatenate([state, action], axis=1)
    w1 = jnp.concatenate([params["w1s"], params["w1a"]], axis=0)
    f1 = jnp.maximum(sa @ w1 + params["b1"], 0.0)
    f2 = jnp.maximum(f1 @ params["w2s"] + params["b2s"] + action @ params["w2a"], 0.0)
    q = f2 @ params["w3"].T + params["b3"].T
    return jnp.squeeze(q)


if __name__ == "__main__":
    # Small shapes consistent with the module:
    #   input_shape[-1] = dim_state + dim_action, n_features = (32, 32), n_output = 1
    batch = 2
    dim_state = 12
    dim_action = 4
    n_features = (32, 32)
    n_output = 1

    key = jax.random.PRNGKey(0)
    k_s, k_a, k_p = jax.random.split(key, 3)

    state = jax.random.normal(k_s, (batch, dim_state), jnp.float32)
    action = jax.random.normal(k_a, (batch, dim_action), jnp.float32)
    params = init_params(k_p, dim_state, dim_action, n_features, n_output)

    q = jax.block_until_ready(td3_critic_forward(state, action, params))
    q_ref = reference_forward(state, action, params)
    np.testing.assert_allclose(np.asarray(q), np.asarray(q_ref), rtol=1e-5, atol=1e-5)
    assert q.shape == (batch,), f"expected squeezed shape ({batch},), got {q.shape}"

    # Multi-tile path: batch > tile cap forces 128-aligned tiles + a >1-step
    # grid; padded rows are sliced off before returning.
    batch2 = 1000
    k_s2, k_a2 = jax.random.split(jax.random.fold_in(key, 7), 2)
    state2 = jax.random.normal(k_s2, (batch2, dim_state), jnp.float32)
    action2 = jax.random.normal(k_a2, (batch2, dim_action), jnp.float32)
    q2 = jax.block_until_ready(td3_critic_forward(state2, action2, params, tile_b=256))
    q2_ref = reference_forward(state2, action2, params)
    np.testing.assert_allclose(np.asarray(q2), np.asarray(q2_ref), rtol=1e-5, atol=1e-5)
    assert q2.shape == (batch2,)

    # Optional bf16 input-stream mode (v6e/v7x HBM lever; not bit-exact).
    q3 = jax.block_until_ready(
        td3_critic_forward(state2, action2, params, bf16_inputs=True))
    np.testing.assert_allclose(np.asarray(q3), np.asarray(q2_ref), rtol=5e-2, atol=5e-2)

    print("KERNEL_OK")
</pallas_src>

<mosaic_0001>
module attributes {stable_mosaic.version = 11 : i64} {
  func.func @td3_critic_kernel(%arg0: i32, %arg1: memref<8x12xf32, #tpu.memory_space<vmem>>, %arg2: memref<8x4xf32, #tpu.memory_space<vmem>>, %arg3: memref<12x32xf32, #tpu.memory_space<vmem>>, %arg4: memref<4x32xf32, #tpu.memory_space<vmem>>, %arg5: memref<1x32xf32, #tpu.memory_space<vmem>>, %arg6: memref<32x32xf32, #tpu.memory_space<vmem>>, %arg7: memref<1x32xf32, #tpu.memory_space<vmem>>, %arg8: memref<4x32xf32, #tpu.memory_space<vmem>>, %arg9: memref<1x32xf32, #tpu.memory_space<vmem>>, %arg10: memref<1x1xf32, #tpu.memory_space<vmem>>, %arg11: memref<1x8xf32, #tpu.memory_space<vmem>>) attributes {dimension_semantics = [#tpu.dimension_semantics<parallel>], iteration_bounds = array<i64: 1>, scalar_prefetch = 0 : i64, scratch_operands = 0 : i64, tpu.core_type = #tpu.core_type<tc>, window_params = [{transform_indices = @transform_0, window_bounds = array<i64: 8, 12>}, {transform_indices = @transform_1, window_bounds = array<i64: 8, 4>}, {pipeline_mode = #tpu.pipeline_mode<synchronous>, transform_indices = @transform_2, window_bounds = array<i64: 12, 32>}, {pipeline_mode = #tpu.pipeline_mode<synchronous>, transform_indices = @transform_3, window_bounds = array<i64: 4, 32>}, {pipeline_mode = #tpu.pipeline_mode<synchronous>, transform_indices = @transform_4, window_bounds = array<i64: 1, 32>}, {pipeline_mode = #tpu.pipeline_mode<synchronous>, transform_indices = @transform_5, window_bounds = array<i64: 32, 32>}, {pipeline_mode = #tpu.pipeline_mode<synchronous>, transform_indices = @transform_6, window_bounds = array<i64: 1, 32>}, {pipeline_mode = #tpu.pipeline_mode<synchronous>, transform_indices = @transform_7, window_bounds = array<i64: 4, 32>}, {pipeline_mode = #tpu.pipeline_mode<synchronous>, transform_indices = @transform_8, window_bounds = array<i64: 1, 32>}, {pipeline_mode = #tpu.pipeline_mode<synchronous>, transform_indices = @transform_9, window_bounds = array<i64: 1, 1>}, {transform_indices = @transform_10, window_bounds = array<i64: 1, 8>}]} {
    %c0 = arith.constant 0 : index
    %c0_0 = arith.constant 0 : index
    %0 = vector.load %arg1[%c0, %c0_0] : memref<8x12xf32, #tpu.memory_space<vmem>>, vector<8x12xf32>
    %c0_1 = arith.constant 0 : index
    %c0_2 = arith.constant 0 : index
    %1 = vector.load %arg2[%c0_1, %c0_2] : memref<8x4xf32, #tpu.memory_space<vmem>>, vector<8x4xf32>
    %c0_3 = arith.constant 0 : index
    %c0_4 = arith.constant 0 : index
    %2 = vector.load %arg3[%c0_3, %c0_4] : memref<12x32xf32, #tpu.memory_space<vmem>>, vector<12x32xf32>
    %cst = arith.constant dense<0.000000e+00> : vector<8x32xf32>
    %3 = tpu.matmul %0, %2, %cst {dimension_numbers = #tpu.dot_dimension_numbers<[1], [0], [0], [1], [0, 0, 1, 1], [], []>} : vector<8x12xf32>, vector<12x32xf32>, vector<8x32xf32> -> vector<8x32xf32>
    %c0_5 = arith.constant 0 : index
    %c0_6 = arith.constant 0 : index
    %4 = vector.load %arg4[%c0_5, %c0_6] : memref<4x32xf32, #tpu.memory_space<vmem>>, vector<4x32xf32>
    %cst_7 = arith.constant dense<0.000000e+00> : vector<8x32xf32>
    %5 = tpu.matmul %1, %4, %cst_7 {dimension_numbers = #tpu.dot_dimension_numbers<[1], [0], [0], [1], [0, 0, 1, 1], [], []>} : vector<8x4xf32>, vector<4x32xf32>, vector<8x32xf32> -> vector<8x32xf32>
    %6 = arith.addf %3, %5 : vector<8x32xf32>
    %c0_8 = arith.constant 0 : index
    %c0_9 = arith.constant 0 : index
    %7 = vector.load %arg5[%c0_8, %c0_9] : memref<1x32xf32, #tpu.memory_space<vmem>>, vector<1x32xf32>
    %8 = vector.broadcast %7 : vector<1x32xf32> to vector<8x32xf32>
    %9 = arith.addf %6, %8 : vector<8x32xf32>
    %cst_10 = arith.constant 0.000000e+00 : f32
    %10 = vector.broadcast %cst_10 : f32 to vector<8x32xf32>
    %11 = arith.maximumf %9, %10 : vector<8x32xf32>
    %c0_11 = arith.constant 0 : index
    %c0_12 = arith.constant 0 : index
    %12 = vector.load %arg6[%c0_11, %c0_12] : memref<32x32xf32, #tpu.memory_space<vmem>>, vector<32x32xf32>
    %cst_13 = arith.constant dense<0.000000e+00> : vector<8x32xf32>
    %13 = tpu.matmul %11, %12, %cst_13 {dimension_numbers = #tpu.dot_dimension_numbers<[1], [0], [0], [1], [0, 0, 1, 1], [], []>} : vector<8x32xf32>, vector<32x32xf32>, vector<8x32xf32> -> vector<8x32xf32>
    %c0_14 = arith.constant 0 : index
    %c0_15 = arith.constant 0 : index
    %14 = vector.load %arg8[%c0_14, %c0_15] : memref<4x32xf32, #tpu.memory_space<vmem>>, vector<4x32xf32>
    %cst_16 = arith.constant dense<0.000000e+00> : vector<8x32xf32>
    %15 = tpu.matmul %1, %14, %cst_16 {dimension_numbers = #tpu.dot_dimension_numbers<[1], [0], [0], [1], [0, 0, 1, 1], [], []>} : vector<8x4xf32>, vector<4x32xf32>, vector<8x32xf32> -> vector<8x32xf32>
    %16 = arith.addf %13, %15 : vector<8x32xf32>
    %c0_17 = arith.constant 0 : index
    %c0_18 = arith.constant 0 : index
    %17 = vector.load %arg7[%c0_17, %c0_18] : memref<1x32xf32, #tpu.memory_space<vmem>>, vector<1x32xf32>
    %18 = vector.broadcast %17 : vector<1x32xf32> to vector<8x32xf32>
    %19 = arith.addf %16, %18 : vector<8x32xf32>
    %cst_19 = arith.constant 0.000000e+00 : f32
    %20 = vector.broadcast %cst_19 : f32 to vector<8x32xf32>
    %21 = arith.maximumf %19, %20 : vector<8x32xf32>
    %c0_20 = arith.constant 0 : index
    %c0_21 = arith.constant 0 : index
    %22 = vector.load %arg9[%c0_20, %c0_21] : memref<1x32xf32, #tpu.memory_space<vmem>>, vector<1x32xf32>
    %cst_22 = arith.constant dense<0.000000e+00> : vector<1x8xf32>
    %23 = tpu.matmul %22, %21, %cst_22 {dimension_numbers = #tpu.dot_dimension_numbers<[1], [1], [0], [0], [0, 0, 1, 0], [], []>} : vector<1x32xf32>, vector<8x32xf32>, vector<1x8xf32> -> vector<1x8xf32>
    %c0_23 = arith.constant 0 : index
    %c0_24 = arith.constant 0 : index
    %24 = vector.load %arg10[%c0_23, %c0_24] : memref<1x1xf32, #tpu.memory_space<vmem>>, vector<1x1xf32>
    %25 = vector.broadcast %24 : vector<1x1xf32> to vector<1x8xf32>
    %26 = arith.addf %23, %25 : vector<1x8xf32>
    %c0_25 = arith.constant 0 : index
    %c0_26 = arith.constant 0 : index
    %27 = vector.load %arg11[%c0_25, %c0_26] : memref<1x8xf32, #tpu.memory_space<vmem>>, vector<1x8xf32>
    tpu.vector_store %arg11[%c0_25, %c0_26], %26 {strides = array<i32>} : memref<1x8xf32, #tpu.memory_space<vmem>>, vector<1x8xf32>,
    return
  }
  func.func @transform_0(%arg0: i32) -> (i32, i32) {
    %c0_i32 = arith.constant 0 : i32
    %c0_i32_0 = arith.constant 0 : i32
    return %arg0, %c0_i32 : i32, i32
  }
  func.func @transform_1(%arg0: i32) -> (i32, i32) {
    %c0_i32 = arith.constant 0 : i32
    %c0_i32_0 = arith.constant 0 : i32
    return %arg0, %c0_i32 : i32, i32
  }
  func.func @transform_2(%arg0: i32) -> (i32, i32) {
    %c0_i32 = arith.constant 0 : i32
    %c0_i32_0 = arith.constant 0 : i32
    %c0_i32_1 = arith.constant 0 : i32
    return %c0_i32, %c0_i32_0 : i32, i32
  }
  func.func @transform_3(%arg0: i32) -> (i32, i32) {
    %c0_i32 = arith.constant 0 : i32
    %c0_i32_0 = arith.constant 0 : i32
    %c0_i32_1 = arith.constant 0 : i32
    return %c0_i32, %c0_i32_0 : i32, i32
  }
  func.func @transform_4(%arg0: i32) -> (i32, i32) {
    %c0_i32 = arith.constant 0 : i32
    %c0_i32_0 = arith.constant 0 : i32
    %c0_i32_1 = arith.constant 0 : i32
    return %c0_i32, %c0_i32_0 : i32, i32
  }
  func.func @transform_5(%arg0: i32) -> (i32, i32) {
    %c0_i32 = arith.constant 0 : i32
    %c0_i32_0 = arith.constant 0 : i32
    %c0_i32_1 = arith.constant 0 : i32
    return %c0_i32, %c0_i32_0 : i32, i32
  }
  func.func @transform_6(%arg0: i32) -> (i32, i32) {
    %c0_i32 = arith.constant 0 : i32
    %c0_i32_0 = arith.constant 0 : i32
    %c0_i32_1 = arith.constant 0 : i32
    return %c0_i32, %c0_i32_0 : i32, i32
  }
  func.func @transform_7(%arg0: i32) -> (i32, i32) {
    %c0_i32 = arith.constant 0 : i32
    %c0_i32_0 = arith.constant 0 : i32
    %c0_i32_1 = arith.constant 0 : i32
    return %c0_i32, %c0_i32_0 : i32, i32
  }
  func.func @transform_8(%arg0: i32) -> (i32, i32) {
    %c0_i32 = arith.constant 0 : i32
    %c0_i32_0 = arith.constant 0 : i32
    %c0_i32_1 = arith.constant 0 : i32
    return %c0_i32, %c0_i32_0 : i32, i32
  }
  func.func @transform_9(%arg0: i32) -> (i32, i32) {
    %c0_i32 = arith.constant 0 : i32
    %c0_i32_0 = arith.constant 0 : i32
    %c0_i32_1 = arith.constant 0 : i32
    return %c0_i32, %c0_i32_0 : i32, i32
  }
  func.func @transform_10(%arg0: i32) -> (i32, i32) {
    %c0_i32 = arith.constant 0 : i32
    %c0_i32_0 = arith.constant 0 : i32
    return %c0_i32, %arg0 : i32, i32
  }
}

</mosaic_0001>

<llo_original>
// kernel: tpu_custom_call.1
$region0: #{tpu_custom_call.1}
  #allocation0 [shape = 'u32[]', space=smem, size = 0x4, offset = 0x4, fixed_abs, tag = 'smem constant byte address 0x4 - core index']
  #allocation1 [shape = 'u32[144,128]{1,0:T(1,128)}', space=vmem, size = 0x12000, scoped, tag = 'internal scratch']
  #allocation2 [shape = 'f32[1,1]{1,0:T(1,128)S(1)}', space=vmem, size = 0x200, scoped, tag = 'scoped memory for tpu_custom_call.1']
  %s0 = inlined_call_operand.hbm [shape: f32[8,12], index: 0, kind: input, shape index: {}]
  %s1 = inlined_call_operand.vmem [shape: f32[8,4], index: 1, kind: input, shape index: {}]
  %s2 = inlined_call_operand.hbm [shape: f32[12,32], index: 2, kind: input, shape index: {}]
  %s3 = inlined_call_operand.hbm [shape: f32[4,32], index: 3, kind: input, shape index: {}]
  %s4 = inlined_call_operand.vmem [shape: f32[1,32], index: 4, kind: input, shape index: {}]
  %s5 = inlined_call_operand.vmem [shape: f32[32,32], index: 5, kind: input, shape index: {}]
  %s6 = inlined_call_operand.vmem [shape: f32[1,32], index: 6, kind: input, shape index: {}]
  %s7 = inlined_call_operand.vmem [shape: f32[4,32], index: 7, kind: input, shape index: {}]
  %s8 = inlined_call_operand.vmem [shape: f32[1,32], index: 8, kind: input, shape index: {}]
  %s9 = inlined_call_operand.<no memory space> [shape: f32[1,1], index: 9, kind: input, shape index: {}]
  %s10 = inlined_call_operand.hbm [shape: f32[1,8], index: 10, kind: output, shape index: {}]
  %s11 = sld [smem:[#allocation0]]
  $region62: #{tpu_custom_call.1} parent=0
    _
  %s13 = ssub.s32 1, %s11
  %s14 = scalar_select 0, %s13, %s11
  %v15 = vstv %s9
  %16 = vst [vmem:[#allocation2] sm:$0x1] %v15
  $region1: #{tpu_custom_call.1} parent=0
    #allocation3 [shape = 'u8[4096]{0}', space=vmem, size = 0x1000, scoped, tag = 'input window, operand 0, single buffered']
    #allocation4 [shape = 's32[1]{0}', space=sflag, size = 0x4, scoped, tag = 'scoped memory for tpu_custom_call.1']
    #allocation5 [shape = 's32[1]{0}', space=sflag, size = 0x4, scoped, tag = 'scoped memory for tpu_custom_call.1']
    #allocation6 [shape = 'u8[8192]{0}', space=vmem, size = 0x2000, scoped, tag = 'input window, operand 2, single buffered']
    #allocation7 [shape = 's32[1]{0}', space=sflag, size = 0x4, scoped, tag = 'scoped memory for tpu_custom_call.1']
    #allocation8 [shape = 'u8[2048]{0}', space=vmem, size = 0x800, scoped, tag = 'input window, operand 3, single buffered']
    #allocation9 [shape = 'u8[512]{0}', space=vmem, size = 0x400, scoped, tag = 'output window, operand 0, single buffered']
    %17 = vsyncpa [#allocation4], 0
    %18 = vsyncpa [#allocation7], 0
    %19 = vsyncpa [#allocation5], 0
    // Predicated region
    $region2: #{tpu_custom_call.1} parent=1 // pred_check
      _
    $region3: #{tpu_custom_call.1} parent=1 // pred_check_branch
      %21 = sbr.rel (0) target = $region5
    $region4: #{tpu_custom_call.1} parent=1 // pred_region
      %s23 = ssub.s32 128, 128
      %24 = vsyncadd [#allocation4], %s23
      %s26 = sshll.u32 [#allocation3], 4
      %s27 = int_to_ptr.vmem [resolvable:$true] %s26
      %29 = dma.hbm_to_vmem [thread:$0]  %s0, 128, %s27, [#allocation4]
    $region5: #{tpu_custom_call.1} parent=1 // pred_fallthru
      _
    // Predicated region
    $region6: #{tpu_custom_call.1} parent=1 // pred_check
      _
    $region7: #{tpu_custom_call.1} parent=1 // pred_check_branch
      %31 = sbr.rel (0) target = $region9
    $region8: #{tpu_custom_call.1} parent=1 // pred_region
      _
    $region9: #{tpu_custom_call.1} parent=1 // pred_fallthru
      _
    // Predicated region
    $region10: #{tpu_custom_call.1} parent=1 // pred_check
      _
    $region11: #{tpu_custom_call.1} parent=1 // pred_check_branch
      %33 = sbr.rel (0) target = $region13
    $region12: #{tpu_custom_call.1} parent=1 // pred_region
      %s35 = ssub.s32 256, 256
      %36 = vsyncadd [#allocation7], %s35
      %s37 = sshll.u32 [#allocation6], 4
      %s38 = int_to_ptr.vmem [resolvable:$true] %s37
      %43 = dma.hbm_to_vmem [thread:$0]  %s2, 256, %s38, [#allocation7], 128, 128, 8
    $region13: #{tpu_custom_call.1} parent=1 // pred_fallthru
      _
    // Predicated region
    $region14: #{tpu_custom_call.1} parent=1 // pred_check
      _
    $region15: #{tpu_custom_call.1} parent=1 // pred_check_branch
      %45 = sbr.rel (0) target = $region17
    $region16: #{tpu_custom_call.1} parent=1 // pred_region
      %s47 = ssub.s32 64, 64
      %48 = vsyncadd [#allocation7], %s47
      %s50 = sshll.u32 [#allocation8], 4
      %s51 = int_to_ptr.vmem [resolvable:$true] %s50
      %53 = dma.hbm_to_vmem [thread:$0]  %s3, 64, %s51, [#allocation7]
    $region17: #{tpu_custom_call.1} parent=1 // pred_fallthru
      _
    // Predicated region
    $region18: #{tpu_custom_call.1} parent=1 // pred_check
      _
    $region19: #{tpu_custom_call.1} parent=1 // pred_check_branch
      %55 = sbr.rel (0) target = $region21
    $region20: #{tpu_custom_call.1} parent=1 // pred_region
      _
    $region21: #{tpu_custom_call.1} parent=1 // pred_fallthru
      _
    // Predicated region
    $region22: #{tpu_custom_call.1} parent=1 // pred_check
      _
    $region23: #{tpu_custom_call.1} parent=1 // pred_check_branch
      %57 = sbr.rel (0) target = $region25
    $region24: #{tpu_custom_call.1} parent=1 // pred_region
      _
    $region25: #{tpu_custom_call.1} parent=1 // pred_fallthru
      _
    // Predicated region
    $region26: #{tpu_custom_call.1} parent=1 // pred_check
      _
    $region27: #{tpu_custom_call.1} parent=1 // pred_check_branch
      %59 = sbr.rel (0) target = $region29
    $region28: #{tpu_custom_call.1} parent=1 // pred_region
      _
    $region29: #{tpu_custom_call.1} parent=1 // pred_fallthru
      _
    // Predicated region
    $region30: #{tpu_custom_call.1} parent=1 // pred_check
      _
    $region31: #{tpu_custom_call.1} parent=1 // pred_check_branch
      %61 = sbr.rel (0) target = $region33
    $region32: #{tpu_custom_call.1} parent=1 // pred_region
      _
    $region33: #{tpu_custom_call.1} parent=1 // pred_fallthru
      _
    // Predicated region
    $region34: #{tpu_custom_call.1} parent=1 // pred_check
      _
    $region35: #{tpu_custom_call.1} parent=1 // pred_check_branch
      %63 = sbr.rel (0) target = $region37
    $region36: #{tpu_custom_call.1} parent=1 // pred_region
      _
    $region37: #{tpu_custom_call.1} parent=1 // pred_fallthru
      _
    // Predicated region
    $region38: #{tpu_custom_call.1} parent=1 // pred_check
      _
    $region39: #{tpu_custom_call.1} parent=1 // pred_check_branch
      %65 = sbr.rel (0) target = $region41
    $region40: #{tpu_custom_call.1} parent=1 // pred_region
      _
    $region41: #{tpu_custom_call.1} parent=1 // pred_fallthru
      _
    // Predicated region
    $region42: #{tpu_custom_call.1} parent=1 // pred_check
      _
    $region43: #{tpu_custom_call.1} parent=1 // pred_check_branch
      %67 = sbr.rel (0) target = $region45
    $region44: #{tpu_custom_call.1} parent=1 // pred_region
      %68 = dma.done [#allocation4], 128
    $region45: #{tpu_custom_call.1} parent=1 // pred_fallthru
      _
    // Predicated region
    $region46: #{tpu_custom_call.1} parent=1 // pred_check
      _
    $region47: #{tpu_custom_call.1} parent=1 // pred_check_branch
      %70 = sbr.rel (0) target = $region49
    $region48: #{tpu_custom_call.1} parent=1 // pred_region
      %71 = dma.done [#allocation7], 256
    $region49: #{tpu_custom_call.1} parent=1 // pred_fallthru
      _
    // Predicated region
    $region50: #{tpu_custom_call.1} parent=1 // pred_check
      _
    $region51: #{tpu_custom_call.1} parent=1 // pred_check_branch
      %73 = sbr.rel (0) target = $region53
    $region52: #{tpu_custom_call.1} parent=1 // pred_region
      %74 = dma.done [#allocation7], 64
    $region53: #{tpu_custom_call.1} parent=1 // pred_fallthru
      _
    %v75 = vld [vmem:[#allocation3] sm:$0xff]
    %v76 = vld [vmem:[%s1] sm:$0xff]
    %v77 = vld [vmem:[#allocation6] sm:$0xff]
    %v78 = vld [vmem:[#allocation6 + $0x8] sm:$0xf]
    %v79 = vld [vmem:[#allocation8] sm:$0xf]
    %vm80 = vcmask 31744
    %v82 = vsel %vm80, %v76, 0
    %vm84 = vcmask 1043456
    %v86 = vsel %vm84, %v79, 0
    %88 = vmatprep.subr.mxu0 0.0
    %89 = vmatpush1.msra.mxu0 %v86
    %90 = vmatprep.subr.mxu0 0.0
    %91 = vmatpush1.msra.mxu0 0.0
    %92 = vmatprep.subr.mxu0 0.0
    %93 = vmatpush1.msra.mxu0 0.0
    %94 = vmatprep.subr.mxu0 0.0
    %95 = vmatpush1.msra.mxu0 0.0
    %96 = vmatprep.subr.mxu0 0.0
    %97 = vmatpush1.msra.mxu0 0.0
    %98 = vmatprep.subr.mxu0 0.0
    %99 = vmatpush1.msra.mxu0 0.0
    %100 = vmatprep.subr.mxu0 0.0
    %101 = vmatpush1.msra.mxu0 0.0
    %102 = vmatprep.subr.mxu0 0.0
    %103 = vmatpush1.msra.mxu0 0.0
    %104 = vmatprep.subr.mxu0 0.0
    %105 = vmatpush1.msra.mxu0 0.0
    %106 = vmatprep.subr.mxu0 0.0
    %107 = vmatpush1.msra.mxu0 0.0
    %108 = vmatprep.subr.mxu0 0.0
    %109 = vmatpush1.msra.mxu0 0.0
    %110 = vmatprep.subr.mxu0 0.0
    %111 = vmatpush1.msra.mxu0 0.0
    %112 = vmatprep.subr.mxu0 0.0
    %113 = vmatpush1.msra.mxu0 0.0
    %114 = vmatprep.subr.mxu0 0.0
    %115 = vmatpush1.msra.mxu0 0.0
    %116 = vmatprep.subr.mxu0 0.0
    %117 = vmatpush1.msra.mxu0 0.0
    %118 = vmatprep.subr.mxu0 0.0
    %119 = vmatpush1.msra.mxu0 0.0
    %120 = vmatprep.subr.mxu0 0.0
    %121 = vmatpush1.msra.mxu0 0.0
    %122 = vmatprep.subr.mxu0 0.0
    %123 = vmatpush1.msra.mxu0 0.0
    %124 = vmatprep.subr.mxu0 0.0
    %125 = vmatpush1.msra.mxu0 0.0
    %126 = vmatprep.subr.mxu0 0.0
    %127 = vmatpush1.msra.mxu0 0.0
    %128 = vmatprep.subr.mxu0 0.0
    %129 = vmatpush1.msra.mxu0 0.0
    %130 = vmatprep.subr.mxu0 0.0
    %131 = vmatpush1.msra.mxu0 0.0
    %132 = vmatprep.subr.mxu0 0.0
    %133 = vmatpush1.msra.mxu0 0.0
    %134 = vmatprep.subr.mxu0 0.0
    %135 = vmatpush1.msra.mxu0 0.0
    %136 = vmatprep.subr.mxu0 0.0
    %137 = vmatpush1.msra.mxu0 0.0
    %138 = vmatprep.subr.mxu0 0.0
    %139 = vmatpush1.msra.mxu0 0.0
    %140 = vmatprep.subr.mxu0 0.0
    %141 = vmatpush1.msra.mxu0 0.0
    %142 = vmatprep.subr.mxu0 0.0
    %143 = vmatpush1.msra.mxu0 0.0
    %144 = vmatprep.subr.mxu0 0.0
    %145 = vmatpush1.msra.mxu0 0.0
    %146 = vmatprep.subr.mxu0 0.0
    %147 = vmatpush1.msra.mxu0 0.0
    %148 = vmatprep.subr.mxu0 0.0
    %149 = vmatpush1.msra.mxu0 0.0
    %150 = vmatprep.subr.mxu0 0.0
    %151 = vmatpush1.msra.mxu0 0.0
    %152 = vmatprep.mubr.f32.mxu0 0.0
    %153 = vmatmul.mubr.f32.gmra.mrb[0].mxu0 %v82
    %v154 = vpop.f32.mrb[0].mxu0
    %v155 = vadd.f32 0.0, %v154
    %v156 = vpop.f32.mrb[0].mxu0
    %157 = vdwg.mxu0
    %vm158 = vcmask 97280
    %v160 = vsel %vm158, %v75, 0
    %v163 = vsel %vm84, %v78, 0
    %165 = vmatprep.subr.mxu0 0.0
    %166 = vmatpush1.msra.mxu0 %v77
    %167 = vmatprep.subr.mxu0 0.0
    %168 = vmatpush1.msra.mxu0 %v163
    %169 = vmatprep.subr.mxu0 0.0
    %170 = vmatpush1.msra.mxu0 0.0
    %171 = vmatprep.subr.mxu0 0.0
    %172 = vmatpush1.msra.mxu0 0.0
    %173 = vmatprep.subr.mxu0 0.0
    %174 = vmatpush1.msra.mxu0 0.0
    %175 = vmatprep.subr.mxu0 0.0
    %176 = vmatpush1.msra.mxu0 0.0
    %177 = vmatprep.subr.mxu0 0.0
    %178 = vmatpush1.msra.mxu0 0.0
    %179 = vmatprep.subr.mxu0 0.0
    %180 = vmatpush1.msra.mxu0 0.0
    %181 = vmatprep.subr.mxu0 0.0
    %182 = vmatpush1.msra.mxu0 0.0
    %183 = vmatprep.subr.mxu0 0.0
    %184 = vmatpush1.msra.mxu0 0.0
    %185 = vmatprep.subr.mxu0 0.0
    %186 = vmatpush1.msra.mxu0 0.0
    %187 = vmatprep.subr.mxu0 0.0
    %188 = vmatpush1.msra.mxu0 0.0
    %189 = vmatprep.subr.mxu0 0.0
    %190 = vmatpush1.msra.mxu0 0.0
    %191 = vmatprep.subr.mxu0 0.0
    %192 = vmatpush1.msra.mxu0 0.0
    %193 = vmatprep.subr.mxu0 0.0
    %194 = vmatpush1.msra.mxu0 0.0
    %195 = vmatprep.subr.mxu0 0.0
    %196 = vmatpush1.msra.mxu0 0.0
    %197 = vmatprep.subr.mxu0 0.0
    %198 = vmatpush1.msra.mxu0 0.0
    %199 = vmatprep.subr.mxu0 0.0
    %200 = vmatpush1.msra.mxu0 0.0
    %201 = vmatprep.subr.mxu0 0.0
    %202 = vmatpush1.msra.mxu0 0.0
    %203 = vmatprep.subr.mxu0 0.0
    %204 = vmatpush1.msra.mxu0 0.0
    %205 = vmatprep.subr.mxu0 0.0
    %206 = vmatpush1.msra.mxu0 0.0
    %207 = vmatprep.subr.mxu0 0.0
    %208 = vmatpush1.msra.mxu0 0.0
    %209 = vmatprep.subr.mxu0 0.0
    %210 = vmatpush1.msra.mxu0 0.0
    %211 = vmatprep.subr.mxu0 0.0
    %212 = vmatpush1.msra.mxu0 0.0
    %213 = vmatprep.subr.mxu0 0.0
    %214 = vmatpush1.msra.mxu0 0.0
    %215 = vmatprep.subr.mxu0 0.0
    %216 = vmatpush1.msra.mxu0 0.0
    %217 = vmatprep.subr.mxu0 0.0
    %218 = vmatpush1.msra.mxu0 0.0
    %219 = vmatprep.subr.mxu0 0.0
    %220 = vmatpush1.msra.mxu0 0.0
    %221 = vmatprep.subr.mxu0 0.0
    %222 = vmatpush1.msra.mxu0 0.0
    %223 = vmatprep.subr.mxu0 0.0
    %224 = vmatpush1.msra.mxu0 0.0
    %225 = vmatprep.subr.mxu0 0.0
    %226 = vmatpush1.msra.mxu0 0.0
    %227 = vmatprep.subr.mxu0 0.0
    %228 = vmatpush1.msra.mxu0 0.0
    %229 = vmatprep.mubr.f32.mxu0 0.0
    %230 = vmatmul.mubr.f32.gmra.mrb[0].mxu0 %v160
    %v231 = vpop.f32.mrb[0].mxu0
    %v232 = vadd.f32 %v155, %v231
    %v233 = vpop.f32.mrb[0].mxu0
    %234 = vdwg.mxu0
    %v235 = vld [vmem:[%s4] sm:$0x1]
    %v237 = vlaneseq
    %v238 = vshrl.u32 %v237, 7
    %v239 = vsub.s32 0, %v238
    %v240 = vrot.slane %v235, %v239
    %v242 = vadd.f32 %v232, %v240
    %v243 = vmax.f32 %v242, 0.0
    %v244 = vld [vmem:[%s5] sm:$0xff]
    %v245 = vld [vmem:[%s5 + $0x8] sm:$0xff]
    %v246 = vld [vmem:[%s5 + $0x10] sm:$0xff]
    %v247 = vld [vmem:[%s5 + $0x18] sm:$0xff]
    %v248 = vld [vmem:[%s7] sm:$0xf]
    %v250 = vsel %vm84, %v248, 0
    %252 = vmatprep.subr.mxu0 0.0
    %253 = vmatpush1.msra.mxu0 %v250
    %254 = vmatprep.subr.mxu0 0.0
    %255 = vmatpush1.msra.mxu0 0.0
    %256 = vmatprep.subr.mxu0 0.0
    %257 = vmatpush1.msra.mxu0 0.0
    %258 = vmatprep.subr.mxu0 0.0
    %259 = vmatpush1.msra.mxu0 0.0
    %260 = vmatprep.subr.mxu0 0.0
    %261 = vmatpush1.msra.mxu0 0.0
    %262 = vmatprep.subr.mxu0 0.0
    %263 = vmatpush1.msra.mxu0 0.0
    %264 = vmatprep.subr.mxu0 0.0
    %265 = vmatpush1.msra.mxu0 0.0
    %266 = vmatprep.subr.mxu0 0.0
    %267 = vmatpush1.msra.mxu0 0.0
    %268 = vmatprep.subr.mxu0 0.0
    %269 = vmatpush1.msra.mxu0 0.0
    %270 = vmatprep.subr.mxu0 0.0
    %271 = vmatpush1.msra.mxu0 0.0
    %272 = vmatprep.subr.mxu0 0.0
    %273 = vmatpush1.msra.mxu0 0.0
    %274 = vmatprep.subr.mxu0 0.0
    %275 = vmatpush1.msra.mxu0 0.0
    %276 = vmatprep.subr.mxu0 0.0
    %277 = vmatpush1.msra.mxu0 0.0
    %278 = vmatprep.subr.mxu0 0.0
    %279 = vmatpush1.msra.mxu0 0.0
    %280 = vmatprep.subr.mxu0 0.0
    %281 = vmatpush1.msra.mxu0 0.0
    %282 = vmatprep.subr.mxu0 0.0
    %283 = vmatpush1.msra.mxu0 0.0
    %284 = vmatprep.subr.mxu0 0.0
    %285 = vmatpush1.msra.mxu0 0.0
    %286 = vmatprep.subr.mxu0 0.0
    %287 = vmatpush1.msra.mxu0 0.0
    %288 = vmatprep.subr.mxu0 0.0
    %289 = vmatpush1.msra.mxu0 0.0
    %290 = vmatprep.subr.mxu0 0.0
    %291 = vmatpush1.msra.mxu0 0.0
    %292 = vmatprep.subr.mxu0 0.0
    %293 = vmatpush1.msra.mxu0 0.0
    %294 = vmatprep.subr.mxu0 0.0
    %295 = vmatpush1.msra.mxu0 0.0
    %296 = vmatprep.subr.mxu0 0.0
    %297 = vmatpush1.msra.mxu0 0.0
    %298 = vmatprep.subr.mxu0 0.0
    %299 = vmatpush1.msra.mxu0 0.0
    %300 = vmatprep.subr.mxu0 0.0
    %301 = vmatpush1.msra.mxu0 0.0
    %302 = vmatprep.subr.mxu0 0.0
    %303 = vmatpush1.msra.mxu0 0.0
    %304 = vmatprep.subr.mxu0 0.0
    %305 = vmatpush1.msra.mxu0 0.0
    %306 = vmatprep.subr.mxu0 0.0
    %307 = vmatpush1.msra.mxu0 0.0
    %308 = vmatprep.subr.mxu0 0.0
    %309 = vmatpush1.msra.mxu0 0.0
    %310 = vmatprep.subr.mxu0 0.0
    %311 = vmatpush1.msra.mxu0 0.0
    %312 = vmatprep.subr.mxu0 0.0
    %313 = vmatpush1.msra.mxu0 0.0
    %314 = vmatprep.subr.mxu0 0.0
    %315 = vmatpush1.msra.mxu0 0.0
    %316 = vmatprep.mubr.f32.mxu0 0.0
    %317 = vmatmul.mubr.f32.gmra.mrb[0].mxu0 %v82
    %v318 = vpop.f32.mrb[0].mxu0
    %v319 = vadd.f32 0.0, %v318
    %v320 = vpop.f32.mrb[0].mxu0
    %321 = vdwg.mxu0
    %vm322 = vcmask 261120
    %v324 = vsel %vm322, %v243, 0
    %326 = vmatprep.subr.mxu0 0.0
    %327 = vmatpush1.msra.mxu0 %v244
    %328 = vmatprep.subr.mxu0 0.0
    %329 = vmatpush1.msra.mxu0 %v245
    %330 = vmatprep.subr.mxu0 0.0
    %331 = vmatpush1.msra.mxu0 %v246
    %332 = vmatprep.subr.mxu0 0.0
    %333 = vmatpush1.msra.mxu0 %v247
    %334 = vmatprep.subr.mxu0 0.0
    %335 = vmatpush1.msra.mxu0 0.0
    %336 = vmatprep.subr.mxu0 0.0
    %337 = vmatpush1.msra.mxu0 0.0
    %338 = vmatprep.subr.mxu0 0.0
    %339 = vmatpush1.msra.mxu0 0.0
    %340 = vmatprep.subr.mxu0 0.0
    %341 = vmatpush1.msra.mxu0 0.0
    %342 = vmatprep.subr.mxu0 0.0
    %343 = vmatpush1.msra.mxu0 0.0
    %344 = vmatprep.subr.mxu0 0.0
    %345 = vmatpush1.msra.mxu0 0.0
    %346 = vmatprep.subr.mxu0 0.0
    %347 = vmatpush1.msra.mxu0 0.0
    %348 = vmatprep.subr.mxu0 0.0
    %349 = vmatpush1.msra.mxu0 0.0
    %350 = vmatprep.subr.mxu0 0.0
    %351 = vmatpush1.msra.mxu0 0.0
    %352 = vmatprep.subr.mxu0 0.0
    %353 = vmatpush1.msra.mxu0 0.0
    %354 = vmatprep.subr.mxu0 0.0
    %355 = vmatpush1.msra.mxu0 0.0
    %356 = vmatprep.subr.mxu0 0.0
    %357 = vmatpush1.msra.mxu0 0.0
    %358 = vmatprep.subr.mxu0 0.0
    %359 = vmatpush1.msra.mxu0 0.0
    %360 = vmatprep.subr.mxu0 0.0
    %361 = vmatpush1.msra.mxu0 0.0
    %362 = vmatprep.subr.mxu0 0.0
    %363 = vmatpush1.msra.mxu0 0.0
    %364 = vmatprep.subr.mxu0 0.0
    %365 = vmatpush1.msra.mxu0 0.0
    %366 = vmatprep.subr.mxu0 0.0
    %367 = vmatpush1.msra.mxu0 0.0
    %368 = vmatprep.subr.mxu0 0.0
    %369 = vmatpush1.msra.mxu0 0.0
    %370 = vmatprep.subr.mxu0 0.0
    %371 = vmatpush1.msra.mxu0 0.0
    %372 = vmatprep.subr.mxu0 0.0
    %373 = vmatpush1.msra.mxu0 0.0
    %374 = vmatprep.subr.mxu0 0.0
    %375 = vmatpush1.msra.mxu0 0.0
    %376 = vmatprep.subr.mxu0 0.0
    %377 = vmatpush1.msra.mxu0 0.0
    %378 = vmatprep.subr.mxu0 0.0
    %379 = vmatpush1.msra.mxu0 0.0
    %380 = vmatprep.subr.mxu0 0.0
    %381 = vmatpush1.msra.mxu0 0.0
    %382 = vmatprep.subr.mxu0 0.0
    %383 = vmatpush1.msra.mxu0 0.0
    %384 = vmatprep.subr.mxu0 0.0
    %385 = vmatpush1.msra.mxu0 0.0
    %386 = vmatprep.subr.mxu0 0.0
    %387 = vmatpush1.msra.mxu0 0.0
    %388 = vmatprep.subr.mxu0 0.0
    %389 = vmatpush1.msra.mxu0 0.0
    %390 = vmatprep.mubr.f32.mxu0 0.0
    %391 = vmatmul.mubr.f32.gmra.mrb[0].mxu0 %v324
    %v392 = vpop.f32.mrb[0].mxu0
    %v393 = vadd.f32 %v319, %v392
    %v394 = vpop.f32.mrb[0].mxu0
    %395 = vdwg.mxu0
    %v396 = vld [vmem:[%s6] sm:$0x1]
    %v398 = vlaneseq
    %v399 = vshrl.u32 %v398, 7
    %v400 = vsub.s32 0, %v399
    %v401 = vrot.slane %v396, %v400
    %v403 = vadd.f32 %v393, %v401
    %v404 = vmax.f32 %v403, 0.0
    %v405 = vld [vmem:[%s8] sm:$0x1]
    %v406 = vld [vmem:[#allocation2] sm:$0x1]
    %408 = vset.pattern.permute.xlu0 0
    %409 = vperm.xlu0 %408, %v406
    %v410 = vpop.permute.xlu0 %409
    %v412 = vlaneseq
    %v413 = vshrl.u32 %v412, 7
    %v414 = vsub.s32 0, %v413
    %v415 = vrot.slane %v410, %v414
    %v417 = vsel %vm322, %v405, 0
    %v420 = vsel %vm322, %v404, 0
    %422 = vmatprep.subr.mxu0 0.0
    %423 = vmatpush1.xpose.msra.mxu0 %v420
    %424 = vmatprep.subr.mxu0 0.0
    %425 = vmatpush1.xpose.msra.mxu0 0.0
    %426 = vmatprep.subr.mxu0 0.0
    %427 = vmatpush1.xpose.msra.mxu0 0.0
    %428 = vmatprep.subr.mxu0 0.0
    %429 = vmatpush1.xpose.msra.mxu0 0.0
    %430 = vmatprep.subr.mxu0 0.0
    %431 = vmatpush1.xpose.msra.mxu0 0.0
    %432 = vmatprep.subr.mxu0 0.0
    %433 = vmatpush1.xpose.msra.mxu0 0.0
    %434 = vmatprep.subr.mxu0 0.0
    %435 = vmatpush1.xpose.msra.mxu0 0.0
    %436 = vmatprep.subr.mxu0 0.0
    %437 = vmatpush1.xpose.msra.mxu0 0.0
    %438 = vmatprep.subr.mxu0 0.0
    %439 = vmatpush1.xpose.msra.mxu0 0.0
    %440 = vmatprep.subr.mxu0 0.0
    %441 = vmatpush1.xpose.msra.mxu0 0.0
    %442 = vmatprep.subr.mxu0 0.0
    %443 = vmatpush1.xpose.msra.mxu0 0.0
    %444 = vmatprep.subr.mxu0 0.0
    %445 = vmatpush1.xpose.msra.mxu0 0.0
    %446 = vmatprep.subr.mxu0 0.0
    %447 = vmatpush1.xpose.msra.mxu0 0.0
    %448 = vmatprep.subr.mxu0 0.0
    %449 = vmatpush1.xpose.msra.mxu0 0.0
    %450 = vmatprep.subr.mxu0 0.0
    %451 = vmatpush1.xpose.msra.mxu0 0.0
    %452 = vmatprep.subr.mxu0 0.0
    %453 = vmatpush1.xpose.msra.mxu0 0.0
    %454 = vmatprep.subr.mxu0 0.0
    %455 = vmatpush1.xpose.msra.mxu0 0.0
    %456 = vmatprep.subr.mxu0 0.0
    %457 = vmatpush1.xpose.msra.mxu0 0.0
    %458 = vmatprep.subr.mxu0 0.0
    %459 = vmatpush1.xpose.msra.mxu0 0.0
    %460 = vmatprep.subr.mxu0 0.0
    %461 = vmatpush1.xpose.msra.mxu0 0.0
    %462 = vmatprep.subr.mxu0 0.0
    %463 = vmatpush1.xpose.msra.mxu0 0.0
    %464 = vmatprep.subr.mxu0 0.0
    %465 = vmatpush1.xpose.msra.mxu0 0.0
    %466 = vmatprep.subr.mxu0 0.0
    %467 = vmatpush1.xpose.msra.mxu0 0.0
    %468 = vmatprep.subr.mxu0 0.0
    %469 = vmatpush1.xpose.msra.mxu0 0.0
    %470 = vmatprep.subr.mxu0 0.0
    %471 = vmatpush1.xpose.msra.mxu0 0.0
    %472 = vmatprep.subr.mxu0 0.0
    %473 = vmatpush1.xpose.msra.mxu0 0.0
    %474 = vmatprep.subr.mxu0 0.0
    %475 = vmatpush1.xpose.msra.mxu0 0.0
    %476 = vmatprep.subr.mxu0 0.0
    %477 = vmatpush1.xpose.msra.mxu0 0.0
    %478 = vmatprep.subr.mxu0 0.0
    %479 = vmatpush1.xpose.msra.mxu0 0.0
    %480 = vmatprep.subr.mxu0 0.0
    %481 = vmatpush1.xpose.msra.mxu0 0.0
    %482 = vmatprep.subr.mxu0 0.0
    %483 = vmatpush1.xpose.msra.mxu0 0.0
    %484 = vmatprep.subr.mxu0 0.0
    %485 = vmatpush1.xpose.msra.mxu0 0.0
    %486 = vmatprep.mubr.f32.mxu0 0.0
    %487 = vmatmul.mubr.f32.gmra.mrb[0].mxu0 %v417
    %v488 = vpop.f32.mrb[0].mxu0
    %v489 = vadd.f32 %v415, %v488
    %v490 = vpop.f32.mrb[0].mxu0
    %491 = vdwg.mxu0
    %vm492 = vcmask 57344
    %493 = vst.msk [vmem:[#allocation9] sm:$0x1] %vm492, %v489
    // Predicated region
    $region54: #{tpu_custom_call.1} parent=1 // pred_check
      _
    $region55: #{tpu_custom_call.1} parent=1 // pred_check_branch
      %495 = sbr.rel (0) target = $region57
    $region56: #{tpu_custom_call.1} parent=1 // pred_region
      %s497 = ssub.s32 16, 16
      %498 = vsyncadd [#allocation5], %s497
      %s500 = sshll.u32 [#allocation9], 4
      %s501 = int_to_ptr.vmem [resolvable:$true] %s500
      %503 = dma.vmem_to_hbm [thread:$0]  %s501, 16, %s10, [#allocation5]
    $region57: #{tpu_custom_call.1} parent=1 // pred_fallthru
      _
    // Predicated region
    $region58: #{tpu_custom_call.1} parent=1 // pred_check
      _
    $region59: #{tpu_custom_call.1} parent=1 // pred_check_branch
      %505 = sbr.rel (0) target = $region61
    $region60: #{tpu_custom_call.1} parent=1 // pred_region
      %506 = dma.done [#allocation5], 16
    $region61: #{tpu_custom_call.1} parent=1 // pred_fallthru
      _
    %507 = vsyncpa [#allocation4], 1
    %508 = vsyncpa [#allocation7], 1
    %509 = vsyncpa [#allocation5], 1

</llo_original>
